<compile_context>
chip_gen: v5e
topology: v5e:2x2
jax: 0.10.0
libtpu: 0.0.40
codegen_flags: <defaults>
</compile_context>

<pallas_src>
import functools

import jax
import jax.numpy as jnp
from jax.experimental import pallas as pl
from jax.experimental.pallas import tpu as pltpu

LANES = 128  # full vreg lane width; output slab and param slab are this wide


def _round8(n: int) -> int:
    return (n + 7) // 8 * 8


def _encoder_kernel(x_ref, p_ref, out_ref, *,
                    x_dim, z_dim, batch, r_w1, r_w23, r_b1, r_b23):
    x = x_ref[...]                                           # (B, x_dim)

    # Static, aligned, full-lane-width views into the packed parameter slab.
    w1 = p_ref[r_w1:r_w1 + x_dim, :]                         # (x_dim, 128)
    w23 = p_ref[r_w23:r_w23 + LANES, :]                      # (128, 128)
    b1 = p_ref[r_b1:r_b1 + 1, :]                             # (1, 128)
    b23 = p_ref[r_b23:r_b23 + 1, :]                          # (1, 128)

    # ---- fc1 + LeakyReLU(0.02); lanes >= h_dim are zero-padded and stay 0 ----
    h = jnp.dot(x, w1, preferred_element_type=jnp.float32) + b1
    h = jnp.maximum(h, 0.02 * h)                             # (B, 128)

    # ---- fused mu|sigma heads at full lane width: one (128, 128) matmul ----
    musig = jnp.dot(h, w23, preferred_element_type=jnp.float32) + b23  # (B, 128)

    # ---- KL divergence (Encoder.kl_div_batch, summed over the batch) ----
    # Lane-masked full-tile reductions; no mid-vreg slicing of mu / sigma.
    lane = jax.lax.broadcasted_iota(jnp.int32, musig.shape, 1)
    mu_mask = lane < z_dim
    sig_mask = jnp.logical_and(lane >= z_dim, lane < 2 * z_dim)

    sum_mu2 = jnp.sum(jnp.where(mu_mask, musig * musig, 0.0))
    sum_sig = jnp.sum(jnp.where(sig_mask, musig, 0.0))
    safe_sig = jnp.where(sig_mask, musig, 1.0)               # keep log() clean on pad/mu lanes
    sum_log = jnp.sum(jnp.where(sig_mask, jnp.log(safe_sig), 0.0))

    kl = 0.5 * (sum_mu2 + sum_sig - float(batch * z_dim) - 2.0 * sum_log)

    # ---- single lane-dense (B, 128) store: musig + KL packed into lane 127 ----
    row = jax.lax.broadcasted_iota(jnp.int32, musig.shape, 0)
    kl_slot = jnp.logical_and(row == 0, lane == LANES - 1)
    out_ref[...] = jnp.where(kl_slot, kl, musig)


def pack_params(params, x_dim, h_dim, z_dim):
    """Pack all Encoder params into one (rows, 128) f32 slab, 8-aligned bands.

    Layout (all bands full 128 lanes wide, zero-padded):
      [r_w1  : r_w1 +x_dim)  -> fc1 weight  (x_dim, h_dim) in cols [0:h_dim]
      [r_w23 : r_w23+128  )  -> fc2||fc3 weight (h_dim, 2*z_dim) in
                                rows [0:h_dim] x cols [0:2*z_dim], rest 0
      [r_b1 ]                -> fc1 bias in cols [0:h_dim]
      [r_b23]                -> fc2||fc3 bias in cols [0:2*z_dim]
    Zero padding keeps the in-kernel math exact while letting every load,
    matmul and store run at full 128-lane width.
    """
    assert h_dim <= LANES and 2 * z_dim < LANES  # lane 127 reserved for KL

    r_w1 = 0
    r_w23 = r_w1 + _round8(x_dim)
    r_b1 = r_w23 + LANES
    r_b23 = r_b1 + 8
    rows = r_b23 + 8

    w23 = jnp.concatenate([params["w2"], params["w3"]], axis=1)   # (h_dim, 2*z_dim)
    b23 = jnp.concatenate([params["b2"], params["b3"]], axis=1)   # (1, 2*z_dim)

    slab = jnp.zeros((rows, LANES), jnp.float32)
    slab = slab.at[r_w1:r_w1 + x_dim, :h_dim].set(params["w1"])
    slab = slab.at[r_w23:r_w23 + h_dim, :2 * z_dim].set(w23)
    slab = slab.at[r_b1:r_b1 + 1, :h_dim].set(params["b1"])
    slab = slab.at[r_b23:r_b23 + 1, :2 * z_dim].set(b23)
    layout = dict(r_w1=r_w1, r_w23=r_w23, r_b1=r_b1, r_b23=r_b23)
    return slab, layout


def encoder_forward(x, param_slab, layout, *, x_dim, h_dim, z_dim):
    del h_dim  # folded into the padded slab
    B = x.shape[0]
    vmem = pl.BlockSpec(memory_space=pltpu.MemorySpace.VMEM)

    kernel = functools.partial(
        _encoder_kernel, x_dim=x_dim, z_dim=z_dim, batch=B, **layout)

    out = pl.pallas_call(
        kernel,
        out_shape=jax.ShapeDtypeStruct((B, LANES), jnp.float32),  # mu|sigma|...|KL
        in_specs=[vmem, vmem],
        out_specs=vmem,
    )(x, param_slab)

    mu = out[:, :z_dim]
    sigma = out[:, z_dim:2 * z_dim]
    kl = out[0, LANES - 1]
    return mu, sigma, kl


def init_params(key, x_dim, h_dim, z_dim):
    """Synthetic nn.Linear-style params; weights stored (in, out) so y = x @ W + b.

    The sigma-head bias is shifted positive so sigma > 0 for this test init and
    the KL check is meaningful (the kernel itself stays faithful to the PyTorch
    module: sigma is a raw linear output, no exp/softplus).
    """
    ks = jax.random.split(key, 6)

    def lin(kw, kb, fan_in, fan_out):
        bound = 1.0 / jnp.sqrt(fan_in)
        w = jax.random.uniform(kw, (fan_in, fan_out), jnp.float32, -bound, bound)
        b = jax.random.uniform(kb, (1, fan_out), jnp.float32, -bound, bound)
        return w, b

    w1, b1 = lin(ks[0], ks[1], x_dim, h_dim)   # fc1
    w2, b2 = lin(ks[2], ks[3], h_dim, z_dim)   # fc2 (mu head)
    w3, b3 = lin(ks[4], ks[5], h_dim, z_dim)   # fc3 (sigma head)
    b3 = b3 + 3.0                              # test-only: keep sigma > 0
    return dict(w1=w1, b1=b1, w2=w2, b2=b2, w3=w3, b3=b3)


if __name__ == "__main__":
    B, x_dim, h_dim, z_dim = 8, 32, 64, 16

    root = jax.random.PRNGKey(0)
    k_params, k_x = jax.random.split(root)

    params = init_params(k_params, x_dim, h_dim, z_dim)
    param_slab, layout = pack_params(params, x_dim, h_dim, z_dim)
    x = jax.random.normal(k_x, (B, x_dim), jnp.float32)

    mu, sigma, kl = encoder_forward(x, param_slab, layout,
                                    x_dim=x_dim, h_dim=h_dim, z_dim=z_dim)
    jax.block_until_ready((mu, sigma, kl))

    # ---- pure-JAX reference of the same math ----
    h_ref = x @ params["w1"] + params["b1"]
    h_ref = jnp.where(h_ref > 0, h_ref, 0.02 * h_ref)
    mu_ref = h_ref @ params["w2"] + params["b2"]
    sg_ref = h_ref @ params["w3"] + params["b3"]
    kl_per_ref = 0.5 * (jnp.sum(mu_ref ** 2, axis=1) + jnp.sum(sg_ref, axis=1)
                        - z_dim - 2.0 * jnp.sum(jnp.log(sg_ref), axis=1))
    kl_ref = jnp.sum(kl_per_ref)

    assert mu.shape == (B, z_dim) and sigma.shape == (B, z_dim)
    assert jnp.allclose(mu, mu_ref, atol=1e-4, rtol=1e-4)
    assert jnp.allclose(sigma, sg_ref, atol=1e-4, rtol=1e-4)
    assert bool(jnp.isfinite(kl)), "KL must be finite for this (sigma>0) test init"
    assert jnp.allclose(kl, kl_ref, atol=1e-3, rtol=1e-3)

    print("KERNEL_OK")
</pallas_src>

<mosaic_0001>
module attributes {stable_mosaic.version = 11 : i64} {
  func.func @_encoder_kernel(%arg0: memref<8x32xf32, #tpu.memory_space<vmem>>, %arg1: memref<176x128xf32, #tpu.memory_space<vmem>>, %arg2: memref<8x128xf32, #tpu.memory_space<vmem>>) attributes {dimension_semantics = [], scalar_prefetch = 0 : i64, scratch_operands = 0 : i64, tpu.core_type = #tpu.core_type<tc>} {
    %c0 = arith.constant 0 : index
    %c0_0 = arith.constant 0 : index
    %0 = vector.load %arg0[%c0, %c0_0] : memref<8x32xf32, #tpu.memory_space<vmem>>, vector<8x32xf32>
    %c0_1 = arith.constant 0 : index
    %c0_2 = arith.constant 0 : index
    %1 = vector.load %arg1[%c0_1, %c0_2] : memref<176x128xf32, #tpu.memory_space<vmem>>, vector<32x128xf32>
    %c32 = arith.constant 32 : index
    %c0_3 = arith.constant 0 : index
    %2 = vector.load %arg1[%c32, %c0_3] : memref<176x128xf32, #tpu.memory_space<vmem>>, vector<128x128xf32>
    %c160 = arith.constant 160 : index
    %c0_4 = arith.constant 0 : index
    %3 = vector.load %arg1[%c160, %c0_4] : memref<176x128xf32, #tpu.memory_space<vmem>>, vector<1x128xf32>
    %c168 = arith.constant 168 : index
    %c0_5 = arith.constant 0 : index
    %4 = vector.load %arg1[%c168, %c0_5] : memref<176x128xf32, #tpu.memory_space<vmem>>, vector<1x128xf32>
    %cst = arith.constant dense<0.000000e+00> : vector<8x128xf32>
    %5 = tpu.matmul %0, %1, %cst {dimension_numbers = #tpu.dot_dimension_numbers<[1], [0], [0], [1], [0, 0, 1, 1], [], []>} : vector<8x32xf32>, vector<32x128xf32>, vector<8x128xf32> -> vector<8x128xf32>
    %6 = vector.broadcast %3 : vector<1x128xf32> to vector<8x128xf32>
    %7 = arith.addf %5, %6 : vector<8x128xf32>
    %cst_6 = arith.constant 2.000000e-02 : f32
    %8 = vector.broadcast %cst_6 : f32 to vector<8x128xf32>
    %9 = arith.mulf %8, %7 : vector<8x128xf32>
    %10 = arith.maximumf %7, %9 : vector<8x128xf32>
    %cst_7 = arith.constant dense<0.000000e+00> : vector<8x128xf32>
    %11 = tpu.matmul %10, %2, %cst_7 {dimension_numbers = #tpu.dot_dimension_numbers<[1], [0], [0], [1], [0, 0, 1, 1], [], []>} : vector<8x128xf32>, vector<128x128xf32>, vector<8x128xf32> -> vector<8x128xf32>
    %12 = vector.broadcast %4 : vector<1x128xf32> to vector<8x128xf32>
    %13 = arith.addf %11, %12 : vector<8x128xf32>
    %14 = tpu.iota {dimensions = array<i32: 1>} : vector<8x128xi32>
    %c16_i32 = arith.constant 16 : i32
    %15 = vector.broadcast %c16_i32 : i32 to vector<8x128xi32>
    %16 = arith.cmpi slt, %14, %15 : vector<8x128xi32>
    %c16_i32_8 = arith.constant 16 : i32
    %17 = vector.broadcast %c16_i32_8 : i32 to vector<8x128xi32>
    %18 = arith.cmpi sge, %14, %17 : vector<8x128xi32>
    %c32_i32 = arith.constant 32 : i32
    %19 = vector.broadcast %c32_i32 : i32 to vector<8x128xi32>
    %20 = arith.cmpi slt, %14, %19 : vector<8x128xi32>
    %21 = arith.andi %18, %20 : vector<8x128xi1>
    %22 = arith.mulf %13, %13 : vector<8x128xf32>
    %cst_9 = arith.constant 0.000000e+00 : f32
    %23 = vector.broadcast %cst_9 : f32 to vector<8x128xf32>
    %24 = arith.select %16, %22, %23 : vector<8x128xi1>, vector<8x128xf32>
    %25 = vector.shape_cast %24 : vector<8x128xf32> to vector<1x8x128xf32>
    %cst_10 = arith.constant dense<0.000000e+00> : vector<1xf32>
    %26 = vector.multi_reduction <add>, %25, %cst_10 [1, 2] : vector<1x8x128xf32> to vector<1xf32>
    %27 = vector.shape_cast %26 : vector<1xf32> to vector<1x1x1xf32>
    %28 = vector.extract %27[0, 0, 0] : f32 from vector<1x1x1xf32>
    %cst_11 = arith.constant 0.000000e+00 : f32
    %29 = vector.broadcast %cst_11 : f32 to vector<8x128xf32>
    %30 = arith.select %21, %13, %29 : vector<8x128xi1>, vector<8x128xf32>
    %31 = vector.shape_cast %30 : vector<8x128xf32> to vector<1x8x128xf32>
    %cst_12 = arith.constant dense<0.000000e+00> : vector<1xf32>
    %32 = vector.multi_reduction <add>, %31, %cst_12 [1, 2] : vector<1x8x128xf32> to vector<1xf32>
    %33 = vector.shape_cast %32 : vector<1xf32> to vector<1x1x1xf32>
    %34 = vector.extract %33[0, 0, 0] : f32 from vector<1x1x1xf32>
    %cst_13 = arith.constant 1.000000e+00 : f32
    %35 = vector.broadcast %cst_13 : f32 to vector<8x128xf32>
    %36 = arith.select %21, %13, %35 : vector<8x128xi1>, vector<8x128xf32>
    %37 = math.log %36 : vector<8x128xf32>
    %cst_14 = arith.constant 0.000000e+00 : f32
    %38 = vector.broadcast %cst_14 : f32 to vector<8x128xf32>
    %39 = arith.select %21, %37, %38 : vector<8x128xi1>, vector<8x128xf32>
    %40 = vector.shape_cast %39 : vector<8x128xf32> to vector<1x8x128xf32>
    %cst_15 = arith.constant dense<0.000000e+00> : vector<1xf32>
    %41 = vector.multi_reduction <add>, %40, %cst_15 [1, 2] : vector<1x8x128xf32> to vector<1xf32>
    %42 = vector.shape_cast %41 : vector<1xf32> to vector<1x1x1xf32>
    %43 = vector.extract %42[0, 0, 0] : f32 from vector<1x1x1xf32>
    %44 = arith.addf %28, %34 : f32
    %cst_16 = arith.constant 1.280000e+02 : f32
    %45 = arith.subf %44, %cst_16 : f32
    %cst_17 = arith.constant 2.000000e+00 : f32
    %46 = arith.mulf %cst_17, %43 : f32
    %47 = arith.subf %45, %46 : f32
    %cst_18 = arith.constant 5.000000e-01 : f32
    %48 = arith.mulf %cst_18, %47 : f32
    %49 = tpu.iota {dimensions = array<i32: 0>} : vector<8x128xi32>
    %c0_i32 = arith.constant 0 : i32
    %50 = vector.broadcast %c0_i32 : i32 to vector<8x128xi32>
    %51 = arith.cmpi eq, %49, %50 : vector<8x128xi32>
    %c127_i32 = arith.constant 127 : i32
    %52 = vector.broadcast %c127_i32 : i32 to vector<8x128xi32>
    %53 = arith.cmpi eq, %14, %52 : vector<8x128xi32>
    %54 = arith.andi %51, %53 : vector<8x128xi1>
    %55 = vector.broadcast %48 : f32 to vector<8x128xf32>
    %56 = arith.select %54, %55, %13 : vector<8x128xi1>, vector<8x128xf32>
    %c0_19 = arith.constant 0 : index
    %c0_20 = arith.constant 0 : index
    %57 = vector.load %arg2[%c0_19, %c0_20] : memref<8x128xf32, #tpu.memory_space<vmem>>, vector<8x128xf32>
    tpu.vector_store %arg2[%c0_19, %c0_20], %56 {strides = array<i32>} : memref<8x128xf32, #tpu.memory_space<vmem>>, vector<8x128xf32>,
    return
  }
}

</mosaic_0001>

<llo_original>
// kernel: tpu_custom_call.1
$region0: #{tpu_custom_call.1}
  #allocation0 [shape = 'u32[]', space=smem, size = 0x4, offset = 0x4, fixed_abs, tag = 'smem constant byte address 0x4 - core index']
  #allocation1 [shape = 'u32[72,128]{1,0:T(1,128)}', space=vmem, size = 0x9000, scoped, tag = 'internal scratch']
  %s0 = inlined_call_operand.hbm [shape: f32[8,32], index: 0, kind: input, shape index: {}]
  %s1 = inlined_call_operand.hbm [shape: f32[176,128], index: 1, kind: input, shape index: {}]
  %s2 = inlined_call_operand.hbm [shape: f32[8,128], index: 2, kind: output, shape index: {}]
  %s3 = sld [smem:[#allocation0]]
  $region26: #{tpu_custom_call.1} parent=0
    _
  %s5 = ssub.s32 1, %s3
  %s6 = scalar_select 0, %s5, %s3
  $region1: #{tpu_custom_call.1} parent=0
    #allocation2 [shape = 'u8[4096]{0}', space=vmem, size = 0x1000, scoped, tag = 'input window, operand 0, single buffered']
    #allocation3 [shape = 's32[1]{0}', space=sflag, size = 0x4, scoped, tag = 'scoped memory for tpu_custom_call.1']
    #allocation4 [shape = 's32[1]{0}', space=sflag, size = 0x4, scoped, tag = 'scoped memory for tpu_custom_call.1']
    #allocation5 [shape = 'u8[90112]{0}', space=vmem, size = 0x16000, scoped, tag = 'input window, operand 1, single buffered']
    #allocation6 [shape = 's32[1]{0}', space=sflag, size = 0x4, scoped, tag = 'scoped memory for tpu_custom_call.1']
    #allocation7 [shape = 'u8[4096]{0}', space=vmem, size = 0x1000, scoped, tag = 'output window, operand 0, single buffered']
    %7 = vsyncpa [#allocation3], 0
    %8 = vsyncpa [#allocation6], 0
    %9 = vsyncpa [#allocation4], 0
    // Predicated region
    $region2: #{tpu_custom_call.1} parent=1 // pred_check
      _
    $region3: #{tpu_custom_call.1} parent=1 // pred_check_branch
      %11 = sbr.rel (0) target = $region5
    $region4: #{tpu_custom_call.1} parent=1 // pred_region
      %13 = vsyncadd [#allocation3], 0
      %s15 = sshll.u32 %s0, 4
      %s16 = int_to_ptr.hbm [resolvable:$true] %s15
      %s17 = sshll.u32 [#allocation2], 4
      %s18 = int_to_ptr.vmem [resolvable:$true] %s17
      %20 = dma.hbm_to_vmem [thread:$0]  %s16, 128, %s18, [#allocation3]
    $region5: #{tpu_custom_call.1} parent=1 // pred_fallthru
      _
    // Predicated region
    $region6: #{tpu_custom_call.1} parent=1 // pred_check
      _
    $region7: #{tpu_custom_call.1} parent=1 // pred_check_branch
      %22 = sbr.rel (0) target = $region9
    $region8: #{tpu_custom_call.1} parent=1 // pred_region
      %24 = vsyncadd [#allocation6], 0
      %s25 = sshll.u32 %s1, 4
      %s26 = int_to_ptr.hbm [resolvable:$true] %s25
      %s27 = sshll.u32 [#allocation5], 4
      %s28 = int_to_ptr.vmem [resolvable:$true] %s27
      %33 = dma.hbm_to_vmem [thread:$0]  %s26, 2816, %s28, [#allocation6], 128, 128, 8
    $region9: #{tpu_custom_call.1} parent=1 // pred_fallthru
      _
    // Predicated region
    $region10: #{tpu_custom_call.1} parent=1 // pred_check
      _
    $region11: #{tpu_custom_call.1} parent=1 // pred_check_branch
      %35 = sbr.rel (0) target = $region13
    $region12: #{tpu_custom_call.1} parent=1 // pred_region
      %37 = dma.done [#allocation3], 128
    $region13: #{tpu_custom_call.1} parent=1 // pred_fallthru
      _
    // Predicated region
    $region14: #{tpu_custom_call.1} parent=1 // pred_check
      _
    $region15: #{tpu_custom_call.1} parent=1 // pred_check_branch
      %39 = sbr.rel (0) target = $region17
    $region16: #{tpu_custom_call.1} parent=1 // pred_region
      %41 = dma.done [#allocation6], 2816
    $region17: #{tpu_custom_call.1} parent=1 // pred_fallthru
      _
    %v42 = vld [vmem:[#allocation2] sm:$0xff]
    %v43 = vld [vmem:[#allocation5] sm:$0xff]
    %v44 = vld [vmem:[#allocation5 + $0x8] sm:$0xff]
    %v45 = vld [vmem:[#allocation5 + $0x10] sm:$0xff]
    %v46 = vld [vmem:[#allocation5 + $0x18] sm:$0xff]
    %v47 = vld [vmem:[#allocation5 + $0x20] sm:$0xff]
    %v48 = vld [vmem:[#allocation5 + $0x28] sm:$0xff]
    %v49 = vld [vmem:[#allocation5 + $0x30] sm:$0xff]
    %v50 = vld [vmem:[#allocation5 + $0x38] sm:$0xff]
    %v51 = vld [vmem:[#allocation5 + $0x40] sm:$0xff]
    %v52 = vld [vmem:[#allocation5 + $0x48] sm:$0xff]
    %v53 = vld [vmem:[#allocation5 + $0x50] sm:$0xff]
    %v54 = vld [vmem:[#allocation5 + $0x58] sm:$0xff]
    %v55 = vld [vmem:[#allocation5 + $0x60] sm:$0xff]
    %v56 = vld [vmem:[#allocation5 + $0x68] sm:$0xff]
    %v57 = vld [vmem:[#allocation5 + $0x70] sm:$0xff]
    %v58 = vld [vmem:[#allocation5 + $0x78] sm:$0xff]
    %v59 = vld [vmem:[#allocation5 + $0x80] sm:$0xff]
    %v60 = vld [vmem:[#allocation5 + $0x88] sm:$0xff]
    %v61 = vld [vmem:[#allocation5 + $0x90] sm:$0xff]
    %v62 = vld [vmem:[#allocation5 + $0x98] sm:$0xff]
    %v63 = vld [vmem:[#allocation5 + $0xa0] sm:$0x1]
    %v64 = vld [vmem:[#allocation5 + $0xa8] sm:$0x1]
    %v65 = vperm.slane %v63, 0
    %vm66 = vcmask 261120
    %v68 = vsel %vm66, %v42, 0
    %70 = vmatpush.msra.mxu0 0.0
    %71 = vmatpush.msra.mxu0 0.0
    %72 = vmatpush.msra.mxu0 0.0
    %73 = vmatpush.msra.mxu0 0.0
    %74 = vmatpush.msra.mxu0 0.0
    %75 = vmatpush.msra.mxu0 0.0
    %76 = vmatpush.msra.mxu0 0.0
    %77 = vmatpush.msra.mxu0 0.0
    %78 = vmatpush.msra.mxu0 0.0
    %79 = vmatpush.msra.mxu0 0.0
    %80 = vmatpush.msra.mxu0 0.0
    %81 = vmatpush.msra.mxu0 0.0
    %82 = vmatpush.msra.mxu0 %v46
    %83 = vmatpush.msra.mxu0 %v45
    %84 = vmatpush.msra.mxu0 %v44
    %85 = vmatpush.msra.mxu0 %v43
    %86 = vmatmul.f32.gmra.mxu0 %v68
    %v87 = vpop.f32.mrf.mxu0
    %v88 = vadd.f32 %v65, %v87
    %89 = vdwg.mxu0
    %v90 = vmul.f32 %v88, 0.02
    %v91 = vmax.f32 %v88, %v90
    %v92 = vperm.slane %v64, 0
    %93 = vmatpush.msra.mxu0 %v62
    %94 = vmatpush.msra.mxu0 %v61
    %95 = vmatpush.msra.mxu0 %v60
    %96 = vmatpush.msra.mxu0 %v59
    %97 = vmatpush.msra.mxu0 %v58
    %98 = vmatpush.msra.mxu0 %v57
    %99 = vmatpush.msra.mxu0 %v56
    %100 = vmatpush.msra.mxu0 %v55
    %101 = vmatpush.msra.mxu0 %v54
    %102 = vmatpush.msra.mxu0 %v53
    %103 = vmatpush.msra.mxu0 %v52
    %104 = vmatpush.msra.mxu0 %v51
    %105 = vmatpush.msra.mxu0 %v50
    %106 = vmatpush.msra.mxu0 %v49
    %107 = vmatpush.msra.mxu0 %v48
    %108 = vmatpush.msra.mxu0 %v47
    %109 = vmatmul.f32.gmra.mxu0 %v91
    %v110 = vpop.f32.mrf.mxu0
    %v111 = vadd.f32 %v92, %v110
    %112 = vdwg.mxu0
    %v113 = vlaneseq
    %v114 = vand.u32 %v113, 127
    %vm115 = vcmp.lt.s32.totalorder %v114, 16
    %vm116 = vcmp.ge.s32.totalorder %v114, 16
    %vm117 = vcmp.lt.s32.totalorder %v114, 32
    %vm118 = vmand %vm116, %vm117
    %v119 = vmul.f32 %v111, %v111
    %v120 = vsel %vm115, %v119, 0.0
    %121 = vadd.xlane.f32.xlu0 %v120
    %v122 = vpop.xlane.xlu0 %121
    %v123 = vrot.slane %v122, 4
    %v124 = vadd.f32 %v122, %v123
    %v125 = vrot.slane %v124, 2
    %v126 = vadd.f32 %v124, %v125
    %v127 = vrot.slane %v126, 1
    %v128 = vadd.f32 %v126, %v127
    %s129 = vtos %v128
    %v130 = vsel %vm118, %v111, 0.0
    %131 = vadd.xlane.f32.xlu0 %v130
    %v132 = vpop.xlane.xlu0 %131
    %v133 = vrot.slane %v132, 4
    %v134 = vadd.f32 %v132, %v133
    %v135 = vrot.slane %v134, 2
    %v136 = vadd.f32 %v134, %v135
    %v137 = vrot.slane %v136, 1
    %v138 = vadd.f32 %v136, %v137
    %s139 = vtos %v138
    %v140 = vsel %vm118, %v111, 1.0
    %v141 = vlog2.pop %v140
    %v142 = vmul.f32 %v141, 0.6931472
    %v143 = vsel %vm118, %v142, 0.0
    %144 = vadd.xlane.f32.xlu0 %v143
    %v145 = vpop.xlane.xlu0 %144
    %v146 = vrot.slane %v145, 4
    %v147 = vadd.f32 %v145, %v146
    %v148 = vrot.slane %v147, 2
    %v149 = vadd.f32 %v147, %v148
    %v150 = vrot.slane %v149, 1
    %v151 = vadd.f32 %v149, %v150
    %s152 = vtos %v151
    %s153 = sadd.f32 %s129, %s139
    %s154 = ssub.f32 %s153, 128.0
    %s155 = smul.f32 %s152, 2.0
    %s156 = ssub.f32 %s154, %s155
    %s157 = smul.f32 %s156, 0.5
    %v158 = vlaneseq
    %v159 = vshrl.u32 %v158, 7
    %vm160 = vcmp.eq.s32.totalorder %v159, 0
    %vm161 = vcmp.eq.s32.totalorder %v114, 127
    %vm162 = vmand %vm160, %vm161
    %v163 = vstv %s157
    %v164 = vsel %vm162, %v163, %v111
    %165 = vst [vmem:[#allocation7] sm:$0xff] %v164
    // Predicated region
    $region18: #{tpu_custom_call.1} parent=1 // pred_check
      _
    $region19: #{tpu_custom_call.1} parent=1 // pred_check_branch
      %167 = sbr.rel (0) target = $region21
    $region20: #{tpu_custom_call.1} parent=1 // pred_region
      %169 = vsyncadd [#allocation4], 0
      %s171 = sshll.u32 [#allocation7], 4
      %s172 = int_to_ptr.vmem [resolvable:$true] %s171
      %s173 = sshll.u32 %s2, 4
      %s174 = int_to_ptr.hbm [resolvable:$true] %s173
      %176 = dma.vmem_to_hbm [thread:$0]  %s172, 128, %s174, [#allocation4]
    $region21: #{tpu_custom_call.1} parent=1 // pred_fallthru
      _
    // Predicated region
    $region22: #{tpu_custom_call.1} parent=1 // pred_check
      _
    $region23: #{tpu_custom_call.1} parent=1 // pred_check_branch
      %178 = sbr.rel (0) target = $region25
    $region24: #{tpu_custom_call.1} parent=1 // pred_region
      %180 = dma.done [#allocation4], 128
    $region25: #{tpu_custom_call.1} parent=1 // pred_fallthru
      _
    %181 = vsyncpa [#allocation3], 1
    %182 = vsyncpa [#allocation6], 1
    %183 = vsyncpa [#allocation4], 1

</llo_original>
